<compile_context>
chip_gen: v7x
topology: tpu7x:2x2x1
jax: 0.10.0
libtpu: 0.0.40
codegen_flags: <defaults>
</compile_context>

<pallas_src>
import jax
import jax.numpy as jnp
from jax.experimental import pallas as pl
from jax.experimental.pallas import tpu as pltpu

# Small shapes consistent with the module's forward.
B, S, H, D, N = 8, 8, 32, 32, 16
N_PAD = 128  # lane-dense output / rel-weight width; sliced back to N outside

# Advisory cost for XLA's scheduler (f32 everywhere).
_BYTES_ACCESSED = 4 * (2 * B * S * H      # head_x + tail_x
                       + 2 * B * S        # head_m + tail_m
                       + (H + 1) * D      # con-param slab
                       + (2 * D + 1) * N_PAD  # rel-param slab
                       + B * N_PAD)       # output
_FLOPS = (4 * B * S * H                   # masked pooling (mul + add), both halves
          + 2 * 2 * B * H * D             # con_model matmuls (head + tail)
          + 2 * 2 * B * D * N_PAD)        # rel_model split-K matmuls


def _get_score_kernel(hx_ref, hm_ref, tx_ref, tm_ref, cp_ref, rp_ref, s2_ref):
    """Fused Get_score forward (single invocation, everything in VMEM).

    hx_ref : [B, S, H]       head token features
    hm_ref : [B, S]          head float 0/1 mask
    tx_ref : [B, S, H]       tail token features
    tm_ref : [B, S]          tail float 0/1 mask
    cp_ref : [H+1, D]        con_model params: rows 0:H = wc, row H = bc
    rp_ref : [2D+1, N_PAD]   rel_model params: rows 0:D = wrh, D:2D = wrt,
                             row 2D = br (all zero-padded to N_PAD lanes)
    s2_ref : [B, N_PAD]      lane-dense output (cols N: are zero padding)
    """

    def masked_pool(x, m):
        # If an entire mask row is zero, the pooled sums are exactly 0, so the
        # 1e-6 denominator is harmless (pooled stays 0).
        denom = jnp.sum(m, axis=1, keepdims=True) + 1e-6              # [B,1]
        return jnp.sum(x * m[:, :, None], axis=1) / denom             # [B,H]

    pooled_h = masked_pool(hx_ref[...], hm_ref[...])                  # [B,H]
    pooled_t = masked_pool(tx_ref[...], tm_ref[...])                  # [B,H]

    # --- con_model: Linear(H -> D), shared weights for head & tail ---------
    wc = cp_ref[0:H, :]                 # [H,D]   aligned dense load
    bc = cp_ref[H:H + 1, :]             # [1,D]   read ONCE before the dots
    head_emb = jnp.dot(pooled_h, wc, preferred_element_type=jnp.float32) + bc
    tail_emb = jnp.dot(pooled_t, wc, preferred_element_type=jnp.float32) + bc

    # --- rel_model: Linear over concat([head, tail]) as split-K dots --------
    wrh = rp_ref[0:D, :]                # [D,N_PAD] aligned dense load
    wrt = rp_ref[D:2 * D, :]            # [D,N_PAD] aligned dense load
    br = rp_ref[2 * D:2 * D + 1, :]     # [1,N_PAD] read ONCE before the dots
    s2 = (jnp.dot(head_emb, wrh, preferred_element_type=jnp.float32)
          + jnp.dot(tail_emb, wrt, preferred_element_type=jnp.float32)
          + br)                                                        # [B,N_PAD]

    # NOTE: the reference also computes `score = tail_s1 + s2 - 1` but returns
    # s2; that dead path (and the s1 sigmoid head) is intentionally omitted.

    s2_ref[...] = s2.astype(s2_ref.dtype)


def prepare_params(params):
    """One-time packing of the small parameter tensors into two VMEM slabs."""
    wc, bc, wrh, wrt, br = params
    con_p = jnp.concatenate([wc, bc], axis=0)                          # [H+1,D]
    pad_n = lambda a: jnp.pad(a, ((0, 0), (0, N_PAD - a.shape[1])))
    rel_p = jnp.concatenate([pad_n(wrh), pad_n(wrt), pad_n(br)],
                            axis=0)                                    # [2D+1,N_PAD]
    return con_p, rel_p


@jax.jit
def get_score_forward(head_x, head_m, tail_x, tail_m, con_p, rel_p):
    """Returns s2 of shape [B, N]. Parameter slabs come from prepare_params."""
    vmem = pl.BlockSpec(memory_space=pltpu.MemorySpace.VMEM)
    s2_pad = pl.pallas_call(
        _get_score_kernel,
        out_shape=jax.ShapeDtypeStruct((B, N_PAD), jnp.float32),
        in_specs=[vmem, vmem, vmem, vmem, vmem, vmem],
        out_specs=vmem,
        cost_estimate=pl.CostEstimate(
            flops=_FLOPS, transcendentals=0, bytes_accessed=_BYTES_ACCESSED),
    )(head_x, head_m, tail_x, tail_m, con_p, rel_p)
    # Padded columns N: are exactly 0 (zero-padded rel weights/bias); drop them
    # here so downstream consumers never see the padding.
    return s2_pad[:, :N]                                               # [B,N]


def _reference(data, params):
    """Plain-JAX reference of the same forward (exact division)."""
    head_x, head_m, tail_x, tail_m = data
    wc, bc, wrh, wrt, br = params

    def con_model(xx, mm):
        pooled = jnp.sum(xx * mm[:, :, None], axis=1) / (
            jnp.sum(mm, axis=1, keepdims=True) + 1e-6)
        return pooled @ wc + bc

    h_emb = con_model(head_x, head_m)
    t_emb = con_model(tail_x, tail_m)
    return h_emb @ wrh + t_emb @ wrt + br


if __name__ == "__main__":
    key = jax.random.PRNGKey(0)
    ks = jax.random.split(key, 10)

    head_x = jax.random.normal(ks[0], (B, S, H), dtype=jnp.float32)
    tail_x = jax.random.normal(ks[1], (B, S, H), dtype=jnp.float32)
    head_m = (jax.random.uniform(ks[2], (B, S)) > 0.2).astype(jnp.float32)
    tail_m = (jax.random.uniform(ks[3], (B, S)) > 0.2).astype(jnp.float32)

    # Deterministic synthetic parameters (con_model + rel_model weights).
    wc = 0.1 * jax.random.normal(ks[4], (H, D), dtype=jnp.float32)
    bc = 0.1 * jax.random.normal(ks[5], (1, D), dtype=jnp.float32)
    wrh = 0.1 * jax.random.normal(ks[6], (D, N), dtype=jnp.float32)
    wrt = 0.1 * jax.random.normal(ks[7], (D, N), dtype=jnp.float32)
    br = 0.1 * jax.random.normal(ks[8], (1, N), dtype=jnp.float32)

    data = (head_x, head_m, tail_x, tail_m)
    params = (wc, bc, wrh, wrt, br)

    # One-time parameter preparation (hoisted out of the per-call path).
    con_p, rel_p = jax.block_until_ready(prepare_params(params))

    s2 = jax.block_until_ready(
        get_score_forward(head_x, head_m, tail_x, tail_m, con_p, rel_p))
    s2_ref = _reference(data, params)

    assert s2.shape == (B, N)
    # Exact division inside the kernel; remaining delta is MXU vs XLA matmul
    # rounding only.
    assert jnp.allclose(s2, s2_ref, atol=5e-3, rtol=5e-3), "mismatch vs reference"

    # TODO(synk): con_model / rel_model internals are unspecified in the
    # original repo; they are instantiated here as masked-pool + Linear layers.
    print("KERNEL_OK")
</pallas_src>

<mosaic_0001>
module attributes {stable_mosaic.version = 11 : i64} {
  func.func @_get_score_kernel(%arg0: memref<8x8x32xf32, #tpu.memory_space<vmem>>, %arg1: memref<8x8xf32, #tpu.memory_space<vmem>>, %arg2: memref<8x8x32xf32, #tpu.memory_space<vmem>>, %arg3: memref<8x8xf32, #tpu.memory_space<vmem>>, %arg4: memref<33x32xf32, #tpu.memory_space<vmem>>, %arg5: memref<65x128xf32, #tpu.memory_space<vmem>>, %arg6: memref<8x128xf32, #tpu.memory_space<vmem>>) attributes {dimension_semantics = [], scalar_prefetch = 0 : i64, scratch_operands = 0 : i64, tpu.core_type = #tpu.core_type<tc>} {
    %c0 = arith.constant 0 : index
    %c0_0 = arith.constant 0 : index
    %c0_1 = arith.constant 0 : index
    %0 = vector.load %arg0[%c0, %c0_0, %c0_1] : memref<8x8x32xf32, #tpu.memory_space<vmem>>, vector<8x8x32xf32>
    %c0_2 = arith.constant 0 : index
    %c0_3 = arith.constant 0 : index
    %1 = vector.load %arg1[%c0_2, %c0_3] : memref<8x8xf32, #tpu.memory_space<vmem>>, vector<8x8xf32>
    %cst = arith.constant dense<0.000000e+00> : vector<8xf32>
    %2 = vector.multi_reduction <add>, %1, %cst [1] : vector<8x8xf32> to vector<8xf32>
    %3 = vector.shape_cast %2 : vector<8xf32> to vector<8x1xf32>
    %cst_4 = arith.constant 9.99999997E-7 : f32
    %4 = vector.broadcast %cst_4 : f32 to vector<8x1xf32>
    %5 = arith.addf %3, %4 : vector<8x1xf32>
    %6 = vector.shape_cast %1 : vector<8x8xf32> to vector<8x8x1xf32>
    %7 = vector.broadcast %6 : vector<8x8x1xf32> to vector<8x8x32xf32>
    %8 = arith.mulf %0, %7 : vector<8x8x32xf32>
    %cst_5 = arith.constant dense<0.000000e+00> : vector<8x32xf32>
    %9 = vector.multi_reduction <add>, %8, %cst_5 [1] : vector<8x8x32xf32> to vector<8x32xf32>
    %10 = vector.broadcast %5 : vector<8x1xf32> to vector<8x32xf32>
    %11 = arith.divf %9, %10 : vector<8x32xf32>
    %c0_6 = arith.constant 0 : index
    %c0_7 = arith.constant 0 : index
    %c0_8 = arith.constant 0 : index
    %12 = vector.load %arg2[%c0_6, %c0_7, %c0_8] : memref<8x8x32xf32, #tpu.memory_space<vmem>>, vector<8x8x32xf32>
    %c0_9 = arith.constant 0 : index
    %c0_10 = arith.constant 0 : index
    %13 = vector.load %arg3[%c0_9, %c0_10] : memref<8x8xf32, #tpu.memory_space<vmem>>, vector<8x8xf32>
    %cst_11 = arith.constant dense<0.000000e+00> : vector<8xf32>
    %14 = vector.multi_reduction <add>, %13, %cst_11 [1] : vector<8x8xf32> to vector<8xf32>
    %15 = vector.shape_cast %14 : vector<8xf32> to vector<8x1xf32>
    %cst_12 = arith.constant 9.99999997E-7 : f32
    %16 = vector.broadcast %cst_12 : f32 to vector<8x1xf32>
    %17 = arith.addf %15, %16 : vector<8x1xf32>
    %18 = vector.shape_cast %13 : vector<8x8xf32> to vector<8x8x1xf32>
    %19 = vector.broadcast %18 : vector<8x8x1xf32> to vector<8x8x32xf32>
    %20 = arith.mulf %12, %19 : vector<8x8x32xf32>
    %cst_13 = arith.constant dense<0.000000e+00> : vector<8x32xf32>
    %21 = vector.multi_reduction <add>, %20, %cst_13 [1] : vector<8x8x32xf32> to vector<8x32xf32>
    %22 = vector.broadcast %17 : vector<8x1xf32> to vector<8x32xf32>
    %23 = arith.divf %21, %22 : vector<8x32xf32>
    %c0_14 = arith.constant 0 : index
    %c0_15 = arith.constant 0 : index
    %24 = vector.load %arg4[%c0_14, %c0_15] : memref<33x32xf32, #tpu.memory_space<vmem>>, vector<32x32xf32>
    %c32 = arith.constant 32 : index
    %c0_16 = arith.constant 0 : index
    %25 = vector.load %arg4[%c32, %c0_16] : memref<33x32xf32, #tpu.memory_space<vmem>>, vector<1x32xf32>
    %cst_17 = arith.constant dense<0.000000e+00> : vector<8x32xf32>
    %26 = tpu.matmul %11, %24, %cst_17 {dimension_numbers = #tpu.dot_dimension_numbers<[1], [0], [0], [1], [0, 0, 1, 1], [], []>} : vector<8x32xf32>, vector<32x32xf32>, vector<8x32xf32> -> vector<8x32xf32>
    %27 = vector.broadcast %25 : vector<1x32xf32> to vector<8x32xf32>
    %28 = arith.addf %26, %27 : vector<8x32xf32>
    %cst_18 = arith.constant dense<0.000000e+00> : vector<8x32xf32>
    %29 = tpu.matmul %23, %24, %cst_18 {dimension_numbers = #tpu.dot_dimension_numbers<[1], [0], [0], [1], [0, 0, 1, 1], [], []>} : vector<8x32xf32>, vector<32x32xf32>, vector<8x32xf32> -> vector<8x32xf32>
    %30 = vector.broadcast %25 : vector<1x32xf32> to vector<8x32xf32>
    %31 = arith.addf %29, %30 : vector<8x32xf32>
    %c0_19 = arith.constant 0 : index
    %c0_20 = arith.constant 0 : index
    %32 = vector.load %arg5[%c0_19, %c0_20] : memref<65x128xf32, #tpu.memory_space<vmem>>, vector<32x128xf32>
    %c32_21 = arith.constant 32 : index
    %c0_22 = arith.constant 0 : index
    %33 = vector.load %arg5[%c32_21, %c0_22] : memref<65x128xf32, #tpu.memory_space<vmem>>, vector<32x128xf32>
    %c64 = arith.constant 64 : index
    %c0_23 = arith.constant 0 : index
    %34 = vector.load %arg5[%c64, %c0_23] : memref<65x128xf32, #tpu.memory_space<vmem>>, vector<1x128xf32>
    %cst_24 = arith.constant dense<0.000000e+00> : vector<8x128xf32>
    %35 = tpu.matmul %28, %32, %cst_24 {dimension_numbers = #tpu.dot_dimension_numbers<[1], [0], [0], [1], [0, 0, 1, 1], [], []>} : vector<8x32xf32>, vector<32x128xf32>, vector<8x128xf32> -> vector<8x128xf32>
    %cst_25 = arith.constant dense<0.000000e+00> : vector<8x128xf32>
    %36 = tpu.matmul %31, %33, %cst_25 {dimension_numbers = #tpu.dot_dimension_numbers<[1], [0], [0], [1], [0, 0, 1, 1], [], []>} : vector<8x32xf32>, vector<32x128xf32>, vector<8x128xf32> -> vector<8x128xf32>
    %37 = arith.addf %35, %36 : vector<8x128xf32>
    %38 = vector.broadcast %34 : vector<1x128xf32> to vector<8x128xf32>
    %39 = arith.addf %37, %38 : vector<8x128xf32>
    %c0_26 = arith.constant 0 : index
    %c0_27 = arith.constant 0 : index
    %40 = vector.load %arg6[%c0_26, %c0_27] : memref<8x128xf32, #tpu.memory_space<vmem>>, vector<8x128xf32>
    tpu.vector_store %arg6[%c0_26, %c0_27], %39 {strides = array<i32>} : memref<8x128xf32, #tpu.memory_space<vmem>>, vector<8x128xf32>,
    return
  }
}

</mosaic_0001>

<llo_original>
// kernel: get_score_forward.1
$region0: #{get_score_forward.1}
  #allocation0 [shape = 'u32[]', space=smem, size = 0x4, offset = 0x4, fixed_abs, tag = 'smem constant byte address 0x4 - core index']
  #allocation1 [shape = 'u32[144,128]{1,0:T(1,128)}', space=vmem, size = 0x12000, scoped, tag = 'internal scratch']
  %s0 = inlined_call_operand.hbm [shape: f32[8,8,32], index: 0, kind: input, shape index: {}]
  %s1 = inlined_call_operand.vmem [shape: f32[8,8], index: 1, kind: input, shape index: {}]
  %s2 = inlined_call_operand.hbm [shape: f32[8,8,32], index: 2, kind: input, shape index: {}]
  %s3 = inlined_call_operand.vmem [shape: f32[8,8], index: 3, kind: input, shape index: {}]
  %s4 = inlined_call_operand.vmem [shape: f32[33,32], index: 4, kind: input, shape index: {}]
  %s5 = inlined_call_operand.vmem [shape: f32[65,128], index: 5, kind: input, shape index: {}]
  %s6 = inlined_call_operand.hbm [shape: f32[8,128], index: 6, kind: output, shape index: {}]
  %s7 = sld [smem:[#allocation0]]
  $region42: #{get_score_forward.1} parent=0
    _
  %s9 = ssub.s32 1, %s7
  %s10 = scalar_select 0, %s9, %s7
  $region1: #{get_score_forward.1} parent=0
    #allocation2 [shape = 'u8[32768]{0}', space=vmem, size = 0x8000, scoped, tag = 'input window, operand 0, single buffered']
    #allocation3 [shape = 's32[1]{0}', space=sflag, size = 0x4, scoped, tag = 'scoped memory for get_score_forward.1']
    #allocation4 [shape = 's32[1]{0}', space=sflag, size = 0x4, scoped, tag = 'scoped memory for get_score_forward.1']
    #allocation5 [shape = 'u8[32768]{0}', space=vmem, size = 0x8000, scoped, tag = 'input window, operand 2, single buffered']
    #allocation6 [shape = 's32[1]{0}', space=sflag, size = 0x4, scoped, tag = 'scoped memory for get_score_forward.1']
    #allocation7 [shape = 'u8[4096]{0}', space=vmem, size = 0x1000, scoped, tag = 'output window, operand 0, single buffered']
    %11 = vsyncpa [#allocation3], 0
    %12 = vsyncpa [#allocation6], 0
    %13 = vsyncpa [#allocation4], 0
    // Predicated region
    $region2: #{get_score_forward.1} parent=1 // pred_check
      _
    $region3: #{get_score_forward.1} parent=1 // pred_check_branch
      %15 = sbr.rel (0) target = $region5
    $region4: #{get_score_forward.1} parent=1 // pred_region
      %s17 = ssub.s32 1024, 1024
      %18 = vsyncadd [#allocation3], %s17
      %s19 = sshll.u32 [#allocation2], 4
      %s20 = int_to_ptr.vmem [resolvable:$true] %s19
      %25 = dma.hbm_to_vmem [thread:$0]  %s0, 1024, %s20, [#allocation3], 128, 128, 8
    $region5: #{get_score_forward.1} parent=1 // pred_fallthru
      _
    // Predicated region
    $region6: #{get_score_forward.1} parent=1 // pred_check
      _
    $region7: #{get_score_forward.1} parent=1 // pred_check_branch
      %27 = sbr.rel (0) target = $region9
    $region8: #{get_score_forward.1} parent=1 // pred_region
      _
    $region9: #{get_score_forward.1} parent=1 // pred_fallthru
      _
    // Predicated region
    $region10: #{get_score_forward.1} parent=1 // pred_check
      _
    $region11: #{get_score_forward.1} parent=1 // pred_check_branch
      %29 = sbr.rel (0) target = $region13
    $region12: #{get_score_forward.1} parent=1 // pred_region
      %s31 = ssub.s32 1024, 1024
      %32 = vsyncadd [#allocation6], %s31
      %s33 = sshll.u32 [#allocation5], 4
      %s34 = int_to_ptr.vmem [resolvable:$true] %s33
      %39 = dma.hbm_to_vmem [thread:$0]  %s2, 1024, %s34, [#allocation6], 128, 128, 8
    $region13: #{get_score_forward.1} parent=1 // pred_fallthru
      _
    // Predicated region
    $region14: #{get_score_forward.1} parent=1 // pred_check
      _
    $region15: #{get_score_forward.1} parent=1 // pred_check_branch
      %41 = sbr.rel (0) target = $region17
    $region16: #{get_score_forward.1} parent=1 // pred_region
      _
    $region17: #{get_score_forward.1} parent=1 // pred_fallthru
      _
    // Predicated region
    $region18: #{get_score_forward.1} parent=1 // pred_check
      _
    $region19: #{get_score_forward.1} parent=1 // pred_check_branch
      %43 = sbr.rel (0) target = $region21
    $region20: #{get_score_forward.1} parent=1 // pred_region
      _
    $region21: #{get_score_forward.1} parent=1 // pred_fallthru
      _
    // Predicated region
    $region22: #{get_score_forward.1} parent=1 // pred_check
      _
    $region23: #{get_score_forward.1} parent=1 // pred_check_branch
      %45 = sbr.rel (0) target = $region25
    $region24: #{get_score_forward.1} parent=1 // pred_region
      _
    $region25: #{get_score_forward.1} parent=1 // pred_fallthru
      _
    // Predicated region
    $region26: #{get_score_forward.1} parent=1 // pred_check
      _
    $region27: #{get_score_forward.1} parent=1 // pred_check_branch
      %47 = sbr.rel (0) target = $region29
    $region28: #{get_score_forward.1} parent=1 // pred_region
      %48 = dma.done [#allocation3], 1024
    $region29: #{get_score_forward.1} parent=1 // pred_fallthru
      _
    // Predicated region
    $region30: #{get_score_forward.1} parent=1 // pred_check
      _
    $region31: #{get_score_forward.1} parent=1 // pred_check_branch
      %50 = sbr.rel (0) target = $region33
    $region32: #{get_score_forward.1} parent=1 // pred_region
      %51 = dma.done [#allocation6], 1024
    $region33: #{get_score_forward.1} parent=1 // pred_fallthru
      _
    %v52 = vld [vmem:[#allocation2] sm:$0xff]
    %v53 = vld [vmem:[#allocation2 + $0x8] sm:$0xff]
    %v54 = vld [vmem:[#allocation2 + $0x10] sm:$0xff]
    %v55 = vld [vmem:[#allocation2 + $0x18] sm:$0xff]
    %v56 = vld [vmem:[#allocation2 + $0x20] sm:$0xff]
    %v57 = vld [vmem:[#allocation2 + $0x28] sm:$0xff]
    %v58 = vld [vmem:[#allocation2 + $0x30] sm:$0xff]
    %v59 = vld [vmem:[#allocation2 + $0x38] sm:$0xff]
    %v60 = vld [vmem:[%s1] sm:$0xff]
    %vm61 = vcmask 64512
    %v62 = vsel %vm61, %v60, 0.0
    %63 = vadd.xlane.f32.xlu0 %v62
    %v64 = vpop.xlane.xlu0 %63
    %v65 = vadd.f32 %v64, 1e-06
    %v66 = vlaneseq
    %v67 = vshrl.u32 %v66, 7
    %v68 = vsub.s32 0, %v67
    %v69 = vrot.slane %v60, %v68
    %71 = vbcast.lane.b32.xlu0 %v69, 256
    %v72 = vpop.permute.xlu0 %71
    %v73 = vlaneseq
    %v74 = vshrl.u32 %v73, 7
    %v75 = vsub.s32 1, %v74
    %v76 = vrot.slane %v60, %v75
    %78 = vbcast.lane.b32.xlu0 %v76, 256
    %v79 = vpop.permute.xlu0 %78
    %v80 = vlaneseq
    %v81 = vshrl.u32 %v80, 7
    %v82 = vsub.s32 2, %v81
    %v83 = vrot.slane %v60, %v82
    %85 = vbcast.lane.b32.xlu0 %v83, 256
    %v86 = vpop.permute.xlu0 %85
    %v87 = vlaneseq
    %v88 = vshrl.u32 %v87, 7
    %v89 = vsub.s32 3, %v88
    %v90 = vrot.slane %v60, %v89
    %92 = vbcast.lane.b32.xlu0 %v90, 256
    %v93 = vpop.permute.xlu0 %92
    %v94 = vlaneseq
    %v95 = vshrl.u32 %v94, 7
    %v96 = vsub.s32 4, %v95
    %v97 = vrot.slane %v60, %v96
    %99 = vbcast.lane.b32.xlu0 %v97, 256
    %v100 = vpop.permute.xlu0 %99
    %v101 = vlaneseq
    %v102 = vshrl.u32 %v101, 7
    %v103 = vsub.s32 5, %v102
    %v104 = vrot.slane %v60, %v103
    %106 = vbcast.lane.b32.xlu0 %v104, 256
    %v107 = vpop.permute.xlu0 %106
    %v108 = vlaneseq
    %v109 = vshrl.u32 %v108, 7
    %v110 = vsub.s32 6, %v109
    %v111 = vrot.slane %v60, %v110
    %113 = vbcast.lane.b32.xlu0 %v111, 256
    %v114 = vpop.permute.xlu0 %113
    %v115 = vlaneseq
    %v116 = vshrl.u32 %v115, 7
    %v117 = vsub.s32 7, %v116
    %v118 = vrot.slane %v60, %v117
    %120 = vbcast.lane.b32.xlu0 %v118, 256
    %v121 = vpop.permute.xlu0 %120
    %v122 = vmul.f32 %v52, %v72
    %v123 = vmul.f32 %v53, %v79
    %v124 = vmul.f32 %v54, %v86
    %v125 = vmul.f32 %v55, %v93
    %v126 = vmul.f32 %v56, %v100
    %v127 = vmul.f32 %v57, %v107
    %v128 = vmul.f32 %v58, %v114
    %v129 = vmul.f32 %v59, %v121
    %vm130 = vcmask 261120
    %v131 = vsel %vm130, %v122, 0.0
    %v132 = vrot.slane %v131, 4
    %v133 = vadd.f32 %v131, %v132
    %v134 = vrot.slane %v133, 2
    %v135 = vadd.f32 %v133, %v134
    %v136 = vrot.slane %v135, 1
    %v137 = vadd.f32 %v135, %v136
    %v138 = vsel %vm130, %v123, 0.0
    %v139 = vrot.slane %v138, 4
    %v140 = vadd.f32 %v138, %v139
    %v141 = vrot.slane %v140, 2
    %v142 = vadd.f32 %v140, %v141
    %v143 = vrot.slane %v142, 1
    %v144 = vadd.f32 %v142, %v143
    %v145 = vsel %vm130, %v124, 0.0
    %v146 = vrot.slane %v145, 4
    %v147 = vadd.f32 %v145, %v146
    %v148 = vrot.slane %v147, 2
    %v149 = vadd.f32 %v147, %v148
    %v150 = vrot.slane %v149, 1
    %v151 = vadd.f32 %v149, %v150
    %v152 = vsel %vm130, %v125, 0.0
    %v153 = vrot.slane %v152, 4
    %v154 = vadd.f32 %v152, %v153
    %v155 = vrot.slane %v154, 2
    %v156 = vadd.f32 %v154, %v155
    %v157 = vrot.slane %v156, 1
    %v158 = vadd.f32 %v156, %v157
    %v159 = vsel %vm130, %v126, 0.0
    %v160 = vrot.slane %v159, 4
    %v161 = vadd.f32 %v159, %v160
    %v162 = vrot.slane %v161, 2
    %v163 = vadd.f32 %v161, %v162
    %v164 = vrot.slane %v163, 1
    %v165 = vadd.f32 %v163, %v164
    %v166 = vsel %vm130, %v127, 0.0
    %v167 = vrot.slane %v166, 4
    %v168 = vadd.f32 %v166, %v167
    %v169 = vrot.slane %v168, 2
    %v170 = vadd.f32 %v168, %v169
    %v171 = vrot.slane %v170, 1
    %v172 = vadd.f32 %v170, %v171
    %v173 = vsel %vm130, %v128, 0.0
    %v174 = vrot.slane %v173, 4
    %v175 = vadd.f32 %v173, %v174
    %v176 = vrot.slane %v175, 2
    %v177 = vadd.f32 %v175, %v176
    %v178 = vrot.slane %v177, 1
    %v179 = vadd.f32 %v177, %v178
    %v180 = vsel %vm130, %v129, 0.0
    %v181 = vrot.slane %v180, 4
    %v182 = vadd.f32 %v180, %v181
    %v183 = vrot.slane %v182, 2
    %v184 = vadd.f32 %v182, %v183
    %v185 = vrot.slane %v184, 1
    %v186 = vadd.f32 %v184, %v185
    %v188 = vrot.slane %v65, 1
    %v189 = vrot.slane %v65, 2
    %v190 = vrot.slane %v65, 3
    %v191 = vrot.slane %v65, 4
    %v192 = vrot.slane %v65, 5
    %v193 = vrot.slane %v65, 6
    %v194 = vrot.slane %v65, 7
    %v203 = vrcp.pop %v65
    %v204 = vmul.f32 %v137, %v203
    %v205 = vrcp.pop %v188
    %v206 = vmul.f32 %v144, %v205
    %v207 = vrcp.pop %v189
    %v208 = vmul.f32 %v151, %v207
    %v209 = vrcp.pop %v190
    %v210 = vmul.f32 %v158, %v209
    %v211 = vrcp.pop %v191
    %v212 = vmul.f32 %v165, %v211
    %v213 = vrcp.pop %v192
    %v214 = vmul.f32 %v172, %v213
    %v215 = vrcp.pop %v193
    %v216 = vmul.f32 %v179, %v215
    %v217 = vrcp.pop %v194
    %v218 = vmul.f32 %v186, %v217
    %v219 = vld [vmem:[#allocation5] sm:$0xff]
    %v220 = vld [vmem:[#allocation5 + $0x8] sm:$0xff]
    %v221 = vld [vmem:[#allocation5 + $0x10] sm:$0xff]
    %v222 = vld [vmem:[#allocation5 + $0x18] sm:$0xff]
    %v223 = vld [vmem:[#allocation5 + $0x20] sm:$0xff]
    %v224 = vld [vmem:[#allocation5 + $0x28] sm:$0xff]
    %v225 = vld [vmem:[#allocation5 + $0x30] sm:$0xff]
    %v226 = vld [vmem:[#allocation5 + $0x38] sm:$0xff]
    %v227 = vld [vmem:[%s3] sm:$0xff]
    %v228 = vsel %vm61, %v227, 0.0
    %229 = vadd.xlane.f32.xlu0 %v228
    %v230 = vpop.xlane.xlu0 %229
    %v231 = vadd.f32 %v230, 1e-06
    %v232 = vlaneseq
    %v233 = vshrl.u32 %v232, 7
    %v234 = vsub.s32 0, %v233
    %v235 = vrot.slane %v227, %v234
    %237 = vbcast.lane.b32.xlu0 %v235, 256
    %v238 = vpop.permute.xlu0 %237
    %v239 = vlaneseq
    %v240 = vshrl.u32 %v239, 7
    %v241 = vsub.s32 1, %v240
    %v242 = vrot.slane %v227, %v241
    %244 = vbcast.lane.b32.xlu0 %v242, 256
    %v245 = vpop.permute.xlu0 %244
    %v246 = vlaneseq
    %v247 = vshrl.u32 %v246, 7
    %v248 = vsub.s32 2, %v247
    %v249 = vrot.slane %v227, %v248
    %251 = vbcast.lane.b32.xlu0 %v249, 256
    %v252 = vpop.permute.xlu0 %251
    %v253 = vlaneseq
    %v254 = vshrl.u32 %v253, 7
    %v255 = vsub.s32 3, %v254
    %v256 = vrot.slane %v227, %v255
    %258 = vbcast.lane.b32.xlu0 %v256, 256
    %v259 = vpop.permute.xlu0 %258
    %v260 = vlaneseq
    %v261 = vshrl.u32 %v260, 7
    %v262 = vsub.s32 4, %v261
    %v263 = vrot.slane %v227, %v262
    %265 = vbcast.lane.b32.xlu0 %v263, 256
    %v266 = vpop.permute.xlu0 %265
    %v267 = vlaneseq
    %v268 = vshrl.u32 %v267, 7
    %v269 = vsub.s32 5, %v268
    %v270 = vrot.slane %v227, %v269
    %272 = vbcast.lane.b32.xlu0 %v270, 256
    %v273 = vpop.permute.xlu0 %272
    %v274 = vlaneseq
    %v275 = vshrl.u32 %v274, 7
    %v276 = vsub.s32 6, %v275
    %v277 = vrot.slane %v227, %v276
    %279 = vbcast.lane.b32.xlu0 %v277, 256
    %v280 = vpop.permute.xlu0 %279
    %v281 = vlaneseq
    %v282 = vshrl.u32 %v281, 7
    %v283 = vsub.s32 7, %v282
    %v284 = vrot.slane %v227, %v283
    %286 = vbcast.lane.b32.xlu0 %v284, 256
    %v287 = vpop.permute.xlu0 %286
    %v288 = vmul.f32 %v219, %v238
    %v289 = vmul.f32 %v220, %v245
    %v290 = vmul.f32 %v221, %v252
    %v291 = vmul.f32 %v222, %v259
    %v292 = vmul.f32 %v223, %v266
    %v293 = vmul.f32 %v224, %v273
    %v294 = vmul.f32 %v225, %v280
    %v295 = vmul.f32 %v226, %v287
    %v296 = vsel %vm130, %v288, 0.0
    %v297 = vrot.slane %v296, 4
    %v298 = vadd.f32 %v296, %v297
    %v299 = vrot.slane %v298, 2
    %v300 = vadd.f32 %v298, %v299
    %v301 = vrot.slane %v300, 1
    %v302 = vadd.f32 %v300, %v301
    %v303 = vsel %vm130, %v289, 0.0
    %v304 = vrot.slane %v303, 4
    %v305 = vadd.f32 %v303, %v304
    %v306 = vrot.slane %v305, 2
    %v307 = vadd.f32 %v305, %v306
    %v308 = vrot.slane %v307, 1
    %v309 = vadd.f32 %v307, %v308
    %v310 = vsel %vm130, %v290, 0.0
    %v311 = vrot.slane %v310, 4
    %v312 = vadd.f32 %v310, %v311
    %v313 = vrot.slane %v312, 2
    %v314 = vadd.f32 %v312, %v313
    %v315 = vrot.slane %v314, 1
    %v316 = vadd.f32 %v314, %v315
    %v317 = vsel %vm130, %v291, 0.0
    %v318 = vrot.slane %v317, 4
    %v319 = vadd.f32 %v317, %v318
    %v320 = vrot.slane %v319, 2
    %v321 = vadd.f32 %v319, %v320
    %v322 = vrot.slane %v321, 1
    %v323 = vadd.f32 %v321, %v322
    %v324 = vsel %vm130, %v292, 0.0
    %v325 = vrot.slane %v324, 4
    %v326 = vadd.f32 %v324, %v325
    %v327 = vrot.slane %v326, 2
    %v328 = vadd.f32 %v326, %v327
    %v329 = vrot.slane %v328, 1
    %v330 = vadd.f32 %v328, %v329
    %v331 = vsel %vm130, %v293, 0.0
    %v332 = vrot.slane %v331, 4
    %v333 = vadd.f32 %v331, %v332
    %v334 = vrot.slane %v333, 2
    %v335 = vadd.f32 %v333, %v334
    %v336 = vrot.slane %v335, 1
    %v337 = vadd.f32 %v335, %v336
    %v338 = vsel %vm130, %v294, 0.0
    %v339 = vrot.slane %v338, 4
    %v340 = vadd.f32 %v338, %v339
    %v341 = vrot.slane %v340, 2
    %v342 = vadd.f32 %v340, %v341
    %v343 = vrot.slane %v342, 1
    %v344 = vadd.f32 %v342, %v343
    %v345 = vsel %vm130, %v295, 0.0
    %v346 = vrot.slane %v345, 4
    %v347 = vadd.f32 %v345, %v346
    %v348 = vrot.slane %v347, 2
    %v349 = vadd.f32 %v347, %v348
    %v350 = vrot.slane %v349, 1
    %v351 = vadd.f32 %v349, %v350
    %v353 = vrot.slane %v231, 1
    %v354 = vrot.slane %v231, 2
    %v355 = vrot.slane %v231, 3
    %v356 = vrot.slane %v231, 4
    %v357 = vrot.slane %v231, 5
    %v358 = vrot.slane %v231, 6
    %v359 = vrot.slane %v231, 7
    %v368 = vrcp.pop %v231
    %v369 = vmul.f32 %v302, %v368
    %v370 = vrcp.pop %v353
    %v371 = vmul.f32 %v309, %v370
    %v372 = vrcp.pop %v354
    %v373 = vmul.f32 %v316, %v372
    %v374 = vrcp.pop %v355
    %v375 = vmul.f32 %v323, %v374
    %v376 = vrcp.pop %v356
    %v377 = vmul.f32 %v330, %v376
    %v378 = vrcp.pop %v357
    %v379 = vmul.f32 %v337, %v378
    %v380 = vrcp.pop %v358
    %v381 = vmul.f32 %v344, %v380
    %v382 = vrcp.pop %v359
    %v383 = vmul.f32 %v351, %v382
    %v384 = vld [vmem:[%s4] sm:$0xff]
    %v385 = vld [vmem:[%s4 + $0x8] sm:$0xff]
    %v386 = vld [vmem:[%s4 + $0x10] sm:$0xff]
    %v387 = vld [vmem:[%s4 + $0x18] sm:$0xff]
    %v388 = vld [vmem:[%s4 + $0x20] sm:$0x1]
    %v389 = vlaneseq
    %v390 = vshrl.u32 %v389, 7
    %v391 = vsub.s32 0, %v390
    %v392 = vrot.slane %v388, %v391
    %v401 = vrot.slane %v206, 7
    %vm402 = vcmask 1041409
    %v403 = vsel %vm402, %v401, %v204
    %v404 = vrot.slane %v208, 6
    %vm405 = vcmask 1042434
    %v406 = vsel %vm405, %v404, %v403
    %v407 = vrot.slane %v210, 5
    %vm408 = vcmask 1043459
    %v409 = vsel %vm408, %v407, %v406
    %v410 = vrot.slane %v212, 4
    %vm411 = vcmask 1044484
    %v412 = vsel %vm411, %v410, %v409
    %v413 = vrot.slane %v214, 3
    %vm414 = vcmask 1045509
    %v415 = vsel %vm414, %v413, %v412
    %v416 = vrot.slane %v216, 2
    %vm417 = vcmask 1046534
    %v418 = vsel %vm417, %v416, %v415
    %v419 = vrot.slane %v218, 1
    %vm420 = vcmask 1047559
    %v421 = vsel %vm420, %v419, %v418
    %v422 = vsel %vm130, %v421, 0
    %424 = vmatprep.subr.mxu0 0.0
    %425 = vmatpush1.msra.mxu0 %v384
    %426 = vmatprep.subr.mxu0 0.0
    %427 = vmatpush1.msra.mxu0 %v385
    %428 = vmatprep.subr.mxu0 0.0
    %429 = vmatpush1.msra.mxu0 %v386
    %430 = vmatprep.subr.mxu0 0.0
    %431 = vmatpush1.msra.mxu0 %v387
    %432 = vmatprep.subr.mxu0 0.0
    %433 = vmatpush1.msra.mxu0 0.0
    %434 = vmatprep.subr.mxu0 0.0
    %435 = vmatpush1.msra.mxu0 0.0
    %436 = vmatprep.subr.mxu0 0.0
    %437 = vmatpush1.msra.mxu0 0.0
    %438 = vmatprep.subr.mxu0 0.0
    %439 = vmatpush1.msra.mxu0 0.0
    %440 = vmatprep.subr.mxu0 0.0
    %441 = vmatpush1.msra.mxu0 0.0
    %442 = vmatprep.subr.mxu0 0.0
    %443 = vmatpush1.msra.mxu0 0.0
    %444 = vmatprep.subr.mxu0 0.0
    %445 = vmatpush1.msra.mxu0 0.0
    %446 = vmatprep.subr.mxu0 0.0
    %447 = vmatpush1.msra.mxu0 0.0
    %448 = vmatprep.subr.mxu0 0.0
    %449 = vmatpush1.msra.mxu0 0.0
    %450 = vmatprep.subr.mxu0 0.0
    %451 = vmatpush1.msra.mxu0 0.0
    %452 = vmatprep.subr.mxu0 0.0
    %453 = vmatpush1.msra.mxu0 0.0
    %454 = vmatprep.subr.mxu0 0.0
    %455 = vmatpush1.msra.mxu0 0.0
    %456 = vmatprep.subr.mxu0 0.0
    %457 = vmatpush1.msra.mxu0 0.0
    %458 = vmatprep.subr.mxu0 0.0
    %459 = vmatpush1.msra.mxu0 0.0
    %460 = vmatprep.subr.mxu0 0.0
    %461 = vmatpush1.msra.mxu0 0.0
    %462 = vmatprep.subr.mxu0 0.0
    %463 = vmatpush1.msra.mxu0 0.0
    %464 = vmatprep.subr.mxu0 0.0
    %465 = vmatpush1.msra.mxu0 0.0
    %466 = vmatprep.subr.mxu0 0.0
    %467 = vmatpush1.msra.mxu0 0.0
    %468 = vmatprep.subr.mxu0 0.0
    %469 = vmatpush1.msra.mxu0 0.0
    %470 = vmatprep.subr.mxu0 0.0
    %471 = vmatpush1.msra.mxu0 0.0
    %472 = vmatprep.subr.mxu0 0.0
    %473 = vmatpush1.msra.mxu0 0.0
    %474 = vmatprep.subr.mxu0 0.0
    %475 = vmatpush1.msra.mxu0 0.0
    %476 = vmatprep.subr.mxu0 0.0
    %477 = vmatpush1.msra.mxu0 0.0
    %478 = vmatprep.subr.mxu0 0.0
    %479 = vmatpush1.msra.mxu0 0.0
    %480 = vmatprep.subr.mxu0 0.0
    %481 = vmatpush1.msra.mxu0 0.0
    %482 = vmatprep.subr.mxu0 0.0
    %483 = vmatpush1.msra.mxu0 0.0
    %484 = vmatprep.subr.mxu0 0.0
    %485 = vmatpush1.msra.mxu0 0.0
    %486 = vmatprep.subr.mxu0 0.0
    %487 = vmatpush1.msra.mxu0 0.0
    %488 = vmatprep.mubr.f32.mxu0 0.0
    %489 = vmatmul.mubr.f32.gmra.mrb[0].mxu0 %v422
    %v490 = vpop.f32.mrb[0].mxu0
    %v491 = vadd.f32 %v392, %v490
    %v492 = vpop.f32.mrb[0].mxu0
    %493 = vdwg.mxu0
    %v502 = vrot.slane %v371, 7
    %v503 = vsel %vm402, %v502, %v369
    %v504 = vrot.slane %v373, 6
    %v505 = vsel %vm405, %v504, %v503
    %v506 = vrot.slane %v375, 5
    %v507 = vsel %vm408, %v506, %v505
    %v508 = vrot.slane %v377, 4
    %v509 = vsel %vm411, %v508, %v507
    %v510 = vrot.slane %v379, 3
    %v511 = vsel %vm414, %v510, %v509
    %v512 = vrot.slane %v381, 2
    %v513 = vsel %vm417, %v512, %v511
    %v514 = vrot.slane %v383, 1
    %v515 = vsel %vm420, %v514, %v513
    %v516 = vsel %vm130, %v515, 0
    %518 = vmatprep.subr.mxu0 0.0
    %519 = vmatpush1.msra.mxu0 %v384
    %520 = vmatprep.subr.mxu0 0.0
    %521 = vmatpush1.msra.mxu0 %v385
    %522 = vmatprep.subr.mxu0 0.0
    %523 = vmatpush1.msra.mxu0 %v386
    %524 = vmatprep.subr.mxu0 0.0
    %525 = vmatpush1.msra.mxu0 %v387
    %526 = vmatprep.subr.mxu0 0.0
    %527 = vmatpush1.msra.mxu0 0.0
    %528 = vmatprep.subr.mxu0 0.0
    %529 = vmatpush1.msra.mxu0 0.0
    %530 = vmatprep.subr.mxu0 0.0
    %531 = vmatpush1.msra.mxu0 0.0
    %532 = vmatprep.subr.mxu0 0.0
    %533 = vmatpush1.msra.mxu0 0.0
    %534 = vmatprep.subr.mxu0 0.0
    %535 = vmatpush1.msra.mxu0 0.0
    %536 = vmatprep.subr.mxu0 0.0
    %537 = vmatpush1.msra.mxu0 0.0
    %538 = vmatprep.subr.mxu0 0.0
    %539 = vmatpush1.msra.mxu0 0.0
    %540 = vmatprep.subr.mxu0 0.0
    %541 = vmatpush1.msra.mxu0 0.0
    %542 = vmatprep.subr.mxu0 0.0
    %543 = vmatpush1.msra.mxu0 0.0
    %544 = vmatprep.subr.mxu0 0.0
    %545 = vmatpush1.msra.mxu0 0.0
    %546 = vmatprep.subr.mxu0 0.0
    %547 = vmatpush1.msra.mxu0 0.0
    %548 = vmatprep.subr.mxu0 0.0
    %549 = vmatpush1.msra.mxu0 0.0
    %550 = vmatprep.subr.mxu0 0.0
    %551 = vmatpush1.msra.mxu0 0.0
    %552 = vmatprep.subr.mxu0 0.0
    %553 = vmatpush1.msra.mxu0 0.0
    %554 = vmatprep.subr.mxu0 0.0
    %555 = vmatpush1.msra.mxu0 0.0
    %556 = vmatprep.subr.mxu0 0.0
    %557 = vmatpush1.msra.mxu0 0.0
    %558 = vmatprep.subr.mxu0 0.0
    %559 = vmatpush1.msra.mxu0 0.0
    %560 = vmatprep.subr.mxu0 0.0
    %561 = vmatpush1.msra.mxu0 0.0
    %562 = vmatprep.subr.mxu0 0.0
    %563 = vmatpush1.msra.mxu0 0.0
    %564 = vmatprep.subr.mxu0 0.0
    %565 = vmatpush1.msra.mxu0 0.0
    %566 = vmatprep.subr.mxu0 0.0
    %567 = vmatpush1.msra.mxu0 0.0
    %568 = vmatprep.subr.mxu0 0.0
    %569 = vmatpush1.msra.mxu0 0.0
    %570 = vmatprep.subr.mxu0 0.0
    %571 = vmatpush1.msra.mxu0 0.0
    %572 = vmatprep.subr.mxu0 0.0
    %573 = vmatpush1.msra.mxu0 0.0
    %574 = vmatprep.subr.mxu0 0.0
    %575 = vmatpush1.msra.mxu0 0.0
    %576 = vmatprep.subr.mxu0 0.0
    %577 = vmatpush1.msra.mxu0 0.0
    %578 = vmatprep.subr.mxu0 0.0
    %579 = vmatpush1.msra.mxu0 0.0
    %580 = vmatprep.subr.mxu0 0.0
    %581 = vmatpush1.msra.mxu0 0.0
    %582 = vmatprep.mubr.f32.mxu0 0.0
    %583 = vmatmul.mubr.f32.gmra.mrb[0].mxu0 %v516
    %v584 = vpop.f32.mrb[0].mxu0
    %v585 = vadd.f32 %v392, %v584
    %v586 = vpop.f32.mrb[0].mxu0
    %587 = vdwg.mxu0
    %v588 = vld [vmem:[%s5] sm:$0xff]
    %v589 = vld [vmem:[%s5 + $0x8] sm:$0xff]
    %v590 = vld [vmem:[%s5 + $0x10] sm:$0xff]
    %v591 = vld [vmem:[%s5 + $0x18] sm:$0xff]
    %v592 = vld [vmem:[%s5 + $0x20] sm:$0xff]
    %v593 = vld [vmem:[%s5 + $0x28] sm:$0xff]
    %v594 = vld [vmem:[%s5 + $0x30] sm:$0xff]
    %v595 = vld [vmem:[%s5 + $0x38] sm:$0xff]
    %v596 = vld [vmem:[%s5 + $0x40] sm:$0x1]
    %v598 = vsel %vm130, %v585, 0
    %600 = vmatprep.subr.mxu0 0.0
    %601 = vmatpush1.msra.mxu0 %v592
    %602 = vmatprep.subr.mxu0 0.0
    %603 = vmatpush1.msra.mxu0 %v593
    %604 = vmatprep.subr.mxu0 0.0
    %605 = vmatpush1.msra.mxu0 %v594
    %606 = vmatprep.subr.mxu0 0.0
    %607 = vmatpush1.msra.mxu0 %v595
    %608 = vmatprep.subr.mxu0 0.0
    %609 = vmatpush1.msra.mxu0 0.0
    %610 = vmatprep.subr.mxu0 0.0
    %611 = vmatpush1.msra.mxu0 0.0
    %612 = vmatprep.subr.mxu0 0.0
    %613 = vmatpush1.msra.mxu0 0.0
    %614 = vmatprep.subr.mxu0 0.0
    %615 = vmatpush1.msra.mxu0 0.0
    %616 = vmatprep.subr.mxu0 0.0
    %617 = vmatpush1.msra.mxu0 0.0
    %618 = vmatprep.subr.mxu0 0.0
    %619 = vmatpush1.msra.mxu0 0.0
    %620 = vmatprep.subr.mxu0 0.0
    %621 = vmatpush1.msra.mxu0 0.0
    %622 = vmatprep.subr.mxu0 0.0
    %623 = vmatpush1.msra.mxu0 0.0
    %624 = vmatprep.subr.mxu0 0.0
    %625 = vmatpush1.msra.mxu0 0.0
    %626 = vmatprep.subr.mxu0 0.0
    %627 = vmatpush1.msra.mxu0 0.0
    %628 = vmatprep.subr.mxu0 0.0
    %629 = vmatpush1.msra.mxu0 0.0
    %630 = vmatprep.subr.mxu0 0.0
    %631 = vmatpush1.msra.mxu0 0.0
    %632 = vmatprep.subr.mxu0 0.0
    %633 = vmatpush1.msra.mxu0 0.0
    %634 = vmatprep.subr.mxu0 0.0
    %635 = vmatpush1.msra.mxu0 0.0
    %636 = vmatprep.subr.mxu0 0.0
    %637 = vmatpush1.msra.mxu0 0.0
    %638 = vmatprep.subr.mxu0 0.0
    %639 = vmatpush1.msra.mxu0 0.0
    %640 = vmatprep.subr.mxu0 0.0
    %641 = vmatpush1.msra.mxu0 0.0
    %642 = vmatprep.subr.mxu0 0.0
    %643 = vmatpush1.msra.mxu0 0.0
    %644 = vmatprep.subr.mxu0 0.0
    %645 = vmatpush1.msra.mxu0 0.0
    %646 = vmatprep.subr.mxu0 0.0
    %647 = vmatpush1.msra.mxu0 0.0
    %648 = vmatprep.subr.mxu0 0.0
    %649 = vmatpush1.msra.mxu0 0.0
    %650 = vmatprep.subr.mxu0 0.0
    %651 = vmatpush1.msra.mxu0 0.0
    %652 = vmatprep.subr.mxu0 0.0
    %653 = vmatpush1.msra.mxu0 0.0
    %654 = vmatprep.subr.mxu0 0.0
    %655 = vmatpush1.msra.mxu0 0.0
    %656 = vmatprep.subr.mxu0 0.0
    %657 = vmatpush1.msra.mxu0 0.0
    %658 = vmatprep.subr.mxu0 0.0
    %659 = vmatpush1.msra.mxu0 0.0
    %660 = vmatprep.subr.mxu0 0.0
    %661 = vmatpush1.msra.mxu0 0.0
    %662 = vmatprep.subr.mxu0 0.0
    %663 = vmatpush1.msra.mxu0 0.0
    %664 = vmatprep.mubr.f32.mxu0 0.0
    %665 = vmatmul.mubr.f32.gmra.mrb[0].mxu0 %v598
    %v666 = vpop.f32.mrb[0].mxu0
    %v667 = vadd.f32 0.0, %v666
    %v668 = vpop.f32.mrb[0].mxu0
    %669 = vdwg.mxu0
    %v671 = vsel %vm130, %v491, 0
    %673 = vmatprep.subr.mxu0 0.0
    %674 = vmatpush1.msra.mxu0 %v588
    %675 = vmatprep.subr.mxu0 0.0
    %676 = vmatpush1.msra.mxu0 %v589
    %677 = vmatprep.subr.mxu0 0.0
    %678 = vmatpush1.msra.mxu0 %v590
    %679 = vmatprep.subr.mxu0 0.0
    %680 = vmatpush1.msra.mxu0 %v591
    %681 = vmatprep.subr.mxu0 0.0
    %682 = vmatpush1.msra.mxu0 0.0
    %683 = vmatprep.subr.mxu0 0.0
    %684 = vmatpush1.msra.mxu0 0.0
    %685 = vmatprep.subr.mxu0 0.0
    %686 = vmatpush1.msra.mxu0 0.0
    %687 = vmatprep.subr.mxu0 0.0
    %688 = vmatpush1.msra.mxu0 0.0
    %689 = vmatprep.subr.mxu0 0.0
    %690 = vmatpush1.msra.mxu0 0.0
    %691 = vmatprep.subr.mxu0 0.0
    %692 = vmatpush1.msra.mxu0 0.0
    %693 = vmatprep.subr.mxu0 0.0
    %694 = vmatpush1.msra.mxu0 0.0
    %695 = vmatprep.subr.mxu0 0.0
    %696 = vmatpush1.msra.mxu0 0.0
    %697 = vmatprep.subr.mxu0 0.0
    %698 = vmatpush1.msra.mxu0 0.0
    %699 = vmatprep.subr.mxu0 0.0
    %700 = vmatpush1.msra.mxu0 0.0
    %701 = vmatprep.subr.mxu0 0.0
    %702 = vmatpush1.msra.mxu0 0.0
    %703 = vmatprep.subr.mxu0 0.0
    %704 = vmatpush1.msra.mxu0 0.0
    %705 = vmatprep.subr.mxu0 0.0
    %706 = vmatpush1.msra.mxu0 0.0
    %707 = vmatprep.subr.mxu0 0.0
    %708 = vmatpush1.msra.mxu0 0.0
    %709 = vmatprep.subr.mxu0 0.0
    %710 = vmatpush1.msra.mxu0 0.0
    %711 = vmatprep.subr.mxu0 0.0
    %712 = vmatpush1.msra.mxu0 0.0
    %713 = vmatprep.subr.mxu0 0.0
    %714 = vmatpush1.msra.mxu0 0.0
    %715 = vmatprep.subr.mxu0 0.0
    %716 = vmatpush1.msra.mxu0 0.0
    %717 = vmatprep.subr.mxu0 0.0
    %718 = vmatpush1.msra.mxu0 0.0
    %719 = vmatprep.subr.mxu0 0.0
    %720 = vmatpush1.msra.mxu0 0.0
    %721 = vmatprep.subr.mxu0 0.0
    %722 = vmatpush1.msra.mxu0 0.0
    %723 = vmatprep.subr.mxu0 0.0
    %724 = vmatpush1.msra.mxu0 0.0
    %725 = vmatprep.subr.mxu0 0.0
    %726 = vmatpush1.msra.mxu0 0.0
    %727 = vmatprep.subr.mxu0 0.0
    %728 = vmatpush1.msra.mxu0 0.0
    %729 = vmatprep.subr.mxu0 0.0
    %730 = vmatpush1.msra.mxu0 0.0
    %731 = vmatprep.subr.mxu0 0.0
    %732 = vmatpush1.msra.mxu0 0.0
    %733 = vmatprep.subr.mxu0 0.0
    %734 = vmatpush1.msra.mxu0 0.0
    %735 = vmatprep.subr.mxu0 0.0
    %736 = vmatpush1.msra.mxu0 0.0
    %737 = vmatprep.mubr.f32.mxu0 0.0
    %738 = vmatmul.mubr.f32.gmra.mrb[0].mxu0 %v671
    %v739 = vpop.f32.mrb[0].mxu0
    %v740 = vadd.f32 %v667, %v739
    %v741 = vpop.f32.mrb[0].mxu0
    %742 = vdwg.mxu0
    %v743 = vlaneseq
    %v744 = vshrl.u32 %v743, 7
    %v745 = vsub.s32 0, %v744
    %v746 = vrot.slane %v596, %v745
    %v747 = vadd.f32 %v740, %v746
    %748 = vst [vmem:[#allocation7] sm:$0xff] %v747
    // Predicated region
    $region34: #{get_score_forward.1} parent=1 // pred_check
      _
    $region35: #{get_score_forward.1} parent=1 // pred_check_branch
      %750 = sbr.rel (0) target = $region37
    $region36: #{get_score_forward.1} parent=1 // pred_region
      %s752 = ssub.s32 128, 128
      %753 = vsyncadd [#allocation4], %s752
      %s755 = sshll.u32 [#allocation7], 4
      %s756 = int_to_ptr.vmem [resolvable:$true] %s755
      %758 = dma.vmem_to_hbm [thread:$0]  %s756, 128, %s6, [#allocation4]
    $region37: #{get_score_forward.1} parent=1 // pred_fallthru
      _
    // Predicated region
    $region38: #{get_score_forward.1} parent=1 // pred_check
      _
    $region39: #{get_score_forward.1} parent=1 // pred_check_branch
      %760 = sbr.rel (0) target = $region41
    $region40: #{get_score_forward.1} parent=1 // pred_region
      %761 = dma.done [#allocation4], 128
    $region41: #{get_score_forward.1} parent=1 // pred_fallthru
      _
    %762 = vsyncpa [#allocation3], 1
    %763 = vsyncpa [#allocation6], 1
    %764 = vsyncpa [#allocation4], 1

</llo_original>
